<compile_context>
chip_gen: v6e
topology: v6e:2x2x1
jax: 0.10.0
libtpu: 0.0.40
codegen_flags: <defaults>
</compile_context>

<pallas_src>
import jax
import jax.numpy as jnp
from jax.experimental import pallas as pl
from jax.experimental.pallas import tpu as pltpu


# ---------------------------------------------------------------------------
# Kernel: broadcast -> mod-256 wrap -> nonzero test -> int8 store
# ---------------------------------------------------------------------------
def _triplet_kernel(m_ref, d_ref, out_ref):
    """One (anchor-tile, positive-tile) grid step.

    m_ref   : [TA, PC]    i32  matches for this (anchor, positive) tile
    d_ref   : [TA, B]     i32  diffs row-strip for this anchor tile (full negative axis)
    out_ref : [TA, PC, B] i8   nonzero mask of (matches ⊗ diffs) mod 256
    """
    m = m_ref[...].astype(jnp.int16)   # values in [0, 255]
    d = d_ref[...].astype(jnp.int16)   # values in [0, 255]
    # torch uint8*uint8 wraps mod 256.  int16 multiply wraps mod 2^16, which preserves
    # the low 8 bits, so (prod & 0xFF) is bit-exact (incl. the wrap-to-zero corner case).
    prod = (m[:, :, None] * d[:, None, :]) & 0xFF
    out_ref[...] = (prod != 0).astype(jnp.int8)


# ---------------------------------------------------------------------------
# Generation-aware VMEM budget & tile selection
# ---------------------------------------------------------------------------
def _vmem_budget_bytes():
    """Scoped-VMEM limit with headroom under the physical per-core capacity."""
    try:
        cap = pltpu.get_tpu_info().vmem_capacity_bytes
    except Exception:
        cap = 64 << 20  # conservative default: v7x has 64 MiB per TensorCore
    # 96 MiB on 128-MiB parts (v5e/v6e), 48 MiB on v7x; never below the 32 MiB floor.
    return max(32 << 20, min(cap - (16 << 20), 96 << 20))


def _choose_tiles(B, target_out_elems):
    """Pick (anchor_tile TA, positive_tile PC) for the [TA, PC, B] int8 output block.

    Layout constraints honored:
      * output block (TA, PC, B): last dim is the full axis; PC multiple of 8
        (preferably 128 -> dense int8 sublane packing) or the full axis.
      * matches block (TA, PC): PC multiple of 128 or the full axis; TA multiple of 8
        or the full axis (same rule covers the diffs (TA, B) strip).
    """
    if B * B * B <= target_out_elems:
        return B, B  # single full block: always layout-legal, tiny working set
    ta_cands = [d for d in range(8, B + 1, 8) if B % d == 0] or [B]
    pc_cands = [d for d in range(128, B + 1, 128) if B % d == 0] or [B]

    def score(tp):
        ta, pc = tp
        e = ta * pc * B
        # Largest tile that fits the budget; if nothing fits, the smallest legal tile.
        return (e <= target_out_elems, e if e <= target_out_elems else -e)

    return max(((ta, pc) for ta in ta_cands for pc in pc_cands), key=score)


# ---------------------------------------------------------------------------
# Wrappers
# ---------------------------------------------------------------------------
def triplet_mask(labels, *, tile_a=None, tile_p=None):
    """Dense [B, B, B] int8 mask: 1 exactly where torch's `triplets` tensor is nonzero."""
    labels = labels.astype(jnp.float32)
    assert labels.ndim == 2, "labels must be [batch, num_classes]"
    B, _ = labels.shape

    # Precompute matches/diffs once in plain XLA (B*B elements).  .byte() emulation:
    # truncate toward zero, wrap mod 256 (exact for the non-negative integer-valued
    # similarities produced by label vectors; negative/huge sims are UB in torch too).
    matches = (labels @ labels.T).astype(jnp.int32) & 0xFF
    diffs = matches ^ 1

    vmem_limit = _vmem_budget_bytes()
    if tile_a is None and tile_p is None:
        # Output tile ~ vmem_limit/24: i16 intermediates + double-buffered i8 output
        # stay well under the scoped limit (~2 MiB tiles on v7x, ~4 MiB on v5e/v6e).
        TA, PC = _choose_tiles(B, vmem_limit // 24)
    else:
        TA = tile_a if tile_a is not None else B
        PC = tile_p if tile_p is not None else B
        assert B % TA == 0 and B % PC == 0, "tiles must divide the batch size"

    # Positive-tile axis innermost: the diffs strip block index is constant across it,
    # so it is fetched only once per anchor tile.
    grid = (B // TA, B // PC)

    mask = pl.pallas_call(
        _triplet_kernel,
        out_shape=jax.ShapeDtypeStruct((B, B, B), jnp.int8),
        grid=grid,
        in_specs=[
            pl.BlockSpec((TA, PC), lambda a, p: (a, p)),  # matches tile
            pl.BlockSpec((TA, B), lambda a, p: (a, 0)),   # diffs strip (negative axis)
        ],
        out_specs=pl.BlockSpec((TA, PC, B), lambda a, p: (a, p, 0)),
        compiler_params=pltpu.CompilerParams(
            dimension_semantics=("parallel", "parallel"),
            vmem_limit_bytes=vmem_limit,
        ),
    )(matches, diffs)
    return mask


def triplet_miner(labels, *, tile_a=None, tile_p=None):
    """TripletMinner.forward equivalent: returns (anchor_idx, pos_idx, neg_idx).

    Must be called on concrete (non-traced) inputs because the number of triplets is
    data-dependent (same as the PyTorch module's variable-length torch.where output).
    """
    trip = jax.jit(triplet_mask, static_argnames=("tile_a", "tile_p"))(
        labels, tile_a=tile_a, tile_p=tile_p)
    # TODO(synk): bit-pack the negative axis in-kernel (uint32 bitmask, B^3/8 bytes) and
    # extract indices from the packed form to cut the nonzero() HBM read traffic ~8x.
    return jnp.nonzero(trip)  # row-major nonzero indices, identical to torch.where


# ---------------------------------------------------------------------------
# Pure-JAX reference (mirrors the torch math, incl. uint8 wrap) for correctness checks
# ---------------------------------------------------------------------------
def _reference_triplets(labels):
    lab = labels.astype(jnp.float32)
    matches = (lab @ lab.T).astype(jnp.int32) & 0xFF
    diffs = matches ^ 1
    trip = (matches[:, :, None] * diffs[:, None, :]) & 0xFF
    return jnp.nonzero(trip)


if __name__ == "__main__":
    key = jax.random.PRNGKey(0)
    key, k1, k2 = jax.random.split(key, 3)

    # Case 1: small one-hot batch -> single full-block path.
    B, C = 8, 4
    cls = jax.random.randint(key, (B,), 0, C)
    labels = jax.nn.one_hot(cls, C, dtype=jnp.float32)            # [8, 4]
    a_idx, p_idx, n_idx = triplet_miner(labels)
    jax.block_until_ready((a_idx, p_idx, n_idx))
    ra, rp, rn = _reference_triplets(labels)
    assert a_idx.shape == ra.shape
    assert bool(jnp.all(a_idx == ra)) and bool(jnp.all(p_idx == rp)) and bool(jnp.all(n_idx == rn))

    # Case 2: exercise the tiled-grid path (grid=(2,1), 3-D output blocks).
    B2, C2 = 16, 4
    cls2 = jax.random.randint(k1, (B2,), 0, C2)
    labels2 = jax.nn.one_hot(cls2, C2, dtype=jnp.float32)         # [16, 4]
    a2, p2, n2 = triplet_miner(labels2, tile_a=8, tile_p=16)
    jax.block_until_ready((a2, p2, n2))
    ra2, rp2, rn2 = _reference_triplets(labels2)
    assert a2.shape == ra2.shape
    assert bool(jnp.all(a2 == ra2)) and bool(jnp.all(p2 == rp2)) and bool(jnp.all(n2 == rn2))

    # Case 3: multi-hot labels (similarities > 1) -> exercises the mod-256 / xor semantics.
    B3, C3 = 8, 6
    labels3 = (jax.random.uniform(k2, (B3, C3)) > 0.5).astype(jnp.float32)  # [8, 6]
    a3, p3, n3 = triplet_miner(labels3)
    jax.block_until_ready((a3, p3, n3))
    ra3, rp3, rn3 = _reference_triplets(labels3)
    assert a3.shape == ra3.shape
    assert bool(jnp.all(a3 == ra3)) and bool(jnp.all(p3 == rp3)) and bool(jnp.all(n3 == rn3))

    print("KERNEL_OK")
</pallas_src>

<mosaic_0001>
module attributes {stable_mosaic.version = 11 : i64} {
  func.func @_triplet_kernel(%arg0: i32, %arg1: i32, %arg2: memref<8x8xi32, #tpu.memory_space<vmem>>, %arg3: memref<8x8xi32, #tpu.memory_space<vmem>>, %arg4: memref<8x8x8xi8, #tpu.memory_space<vmem>>) attributes {dimension_semantics = [#tpu.dimension_semantics<parallel>, #tpu.dimension_semantics<parallel>], iteration_bounds = array<i64: 1, 1>, scalar_prefetch = 0 : i64, scratch_operands = 0 : i64, tpu.core_type = #tpu.core_type<tc>, window_params = [{transform_indices = @transform_0, window_bounds = array<i64: 8, 8>}, {transform_indices = @transform_1, window_bounds = array<i64: 8, 8>}, {transform_indices = @transform_2, window_bounds = array<i64: 8, 8, 8>}]} {
    %c0 = arith.constant 0 : index
    %c0_0 = arith.constant 0 : index
    %0 = vector.load %arg2[%c0, %c0_0] : memref<8x8xi32, #tpu.memory_space<vmem>>, vector<8x8xi32>
    %1 = arith.trunci %0 : vector<8x8xi32> to vector<8x8xi16>
    %c0_1 = arith.constant 0 : index
    %c0_2 = arith.constant 0 : index
    %2 = vector.load %arg3[%c0_1, %c0_2] : memref<8x8xi32, #tpu.memory_space<vmem>>, vector<8x8xi32>
    %3 = arith.trunci %2 : vector<8x8xi32> to vector<8x8xi16>
    %4 = vector.shape_cast %1 : vector<8x8xi16> to vector<8x8x1xi16>
    %5 = vector.shape_cast %3 : vector<8x8xi16> to vector<8x1x8xi16>
    %6 = vector.broadcast %4 : vector<8x8x1xi16> to vector<8x8x8xi16>
    %7 = vector.broadcast %5 : vector<8x1x8xi16> to vector<8x8x8xi16>
    %8 = arith.muli %6, %7 : vector<8x8x8xi16>
    %c255_i16 = arith.constant 255 : i16
    %9 = vector.broadcast %c255_i16 : i16 to vector<8x8x8xi16>
    %10 = arith.andi %8, %9 : vector<8x8x8xi16>
    %c0_i16 = arith.constant 0 : i16
    %11 = vector.broadcast %c0_i16 : i16 to vector<8x8x8xi16>
    %12 = arith.cmpi ne, %10, %11 : vector<8x8x8xi16>
    %13 = arith.extui %12 : vector<8x8x8xi1> to vector<8x8x8xi8>
    %c0_3 = arith.constant 0 : index
    %c0_4 = arith.constant 0 : index
    %c0_5 = arith.constant 0 : index
    %14 = vector.load %arg4[%c0_3, %c0_4, %c0_5] : memref<8x8x8xi8, #tpu.memory_space<vmem>>, vector<8x8x8xi8>
    tpu.vector_store %arg4[%c0_3, %c0_4, %c0_5], %13 {strides = array<i32>} : memref<8x8x8xi8, #tpu.memory_space<vmem>>, vector<8x8x8xi8>,
    return
  }
  func.func @transform_0(%arg0: i32, %arg1: i32) -> (i32, i32) {
    %c0_i32 = arith.constant 0 : i32
    return %arg0, %arg1 : i32, i32
  }
  func.func @transform_1(%arg0: i32, %arg1: i32) -> (i32, i32) {
    %c0_i32 = arith.constant 0 : i32
    %c0_i32_0 = arith.constant 0 : i32
    return %arg0, %c0_i32 : i32, i32
  }
  func.func @transform_2(%arg0: i32, %arg1: i32) -> (i32, i32, i32) {
    %c0_i32 = arith.constant 0 : i32
    %c0_i32_0 = arith.constant 0 : i32
    return %arg0, %arg1, %c0_i32 : i32, i32, i32
  }
}

</mosaic_0001>

<llo_original>
// kernel: triplet_mask.1
$region0: #{triplet_mask.1}
  #allocation0 [shape = 'u32[]', space=smem, size = 0x4, offset = 0x4, fixed_abs, tag = 'smem constant byte address 0x4 - core index']
  #allocation1 [shape = 'u32[144,128]{1,0:T(1,128)}', space=vmem, size = 0x12000, scoped, tag = 'internal scratch']
  %s0 = inlined_call_operand.vmem [shape: s32[8,8], index: 0, kind: input, shape index: {}]
  %s1 = inlined_call_operand.vmem [shape: s32[8,8], index: 1, kind: input, shape index: {}]
  %s2 = inlined_call_operand.hbm [shape: s8[8,8,8], index: 2, kind: output, shape index: {}]
  %s3 = sld [smem:[#allocation0]]
  $region18: #{triplet_mask.1} parent=0
    _
  %s5 = ssub.s32 1, %s3
  %s6 = scalar_select 0, %s5, %s3
  $region1: #{triplet_mask.1} parent=0
    #allocation2 [shape = 'u8[8192]{0}', space=vmem, size = 0x2000, scoped, tag = 'output window, operand 0, single buffered']
    #allocation3 [shape = 's32[1]{0}', space=sflag, size = 0x4, scoped, tag = 'scoped memory for triplet_mask.1']
    %7 = vsyncpa [#allocation3], 0
    // Predicated region
    $region2: #{triplet_mask.1} parent=1 // pred_check
      _
    $region3: #{triplet_mask.1} parent=1 // pred_check_branch
      %9 = sbr.rel (0) target = $region5
    $region4: #{triplet_mask.1} parent=1 // pred_region
      _
    $region5: #{triplet_mask.1} parent=1 // pred_fallthru
      _
    // Predicated region
    $region6: #{triplet_mask.1} parent=1 // pred_check
      _
    $region7: #{triplet_mask.1} parent=1 // pred_check_branch
      %11 = sbr.rel (0) target = $region9
    $region8: #{triplet_mask.1} parent=1 // pred_region
      _
    $region9: #{triplet_mask.1} parent=1 // pred_fallthru
      _
    %v16 = vld [vmem:[%s0] sm:$0xff]
    %v17 = vpack.c.b16 %v16, %v16
    %v18 = vld [vmem:[%s1] sm:$0xff]
    %v19 = vpack.c.b16 %v18, %v18
    %v21 = vpack.i.b16 %v17, %v17
    %v22 = vlaneseq
    %v23 = vshrl.u32 %v22, 7
    %v24 = vsub.s32 0, %v23
    %v25 = vrot.slane %v21, %v24
    %27 = vbcast.lane.c.b16.xlu0 %v25, 256
    %v28 = vpop.permute.xlu0 %27
    %v29 = vshrl.u32 %v17, 16
    %v30 = vpack.i.b16 %v29, %v29
    %v31 = vlaneseq
    %v32 = vshrl.u32 %v31, 7
    %v33 = vsub.s32 0, %v32
    %v34 = vrot.slane %v30, %v33
    %36 = vbcast.lane.c.b16.xlu0 %v34, 256
    %v37 = vpop.permute.xlu0 %36
    %v38 = vlaneseq
    %v39 = vshrl.u32 %v38, 7
    %v40 = vsub.s32 1, %v39
    %v41 = vrot.slane %v21, %v40
    %43 = vbcast.lane.c.b16.xlu0 %v41, 256
    %v44 = vpop.permute.xlu0 %43
    %v45 = vlaneseq
    %v46 = vshrl.u32 %v45, 7
    %v47 = vsub.s32 1, %v46
    %v48 = vrot.slane %v30, %v47
    %50 = vbcast.lane.c.b16.xlu0 %v48, 256
    %v51 = vpop.permute.xlu0 %50
    %v52 = vlaneseq
    %v53 = vshrl.u32 %v52, 7
    %v54 = vsub.s32 2, %v53
    %v55 = vrot.slane %v21, %v54
    %57 = vbcast.lane.c.b16.xlu0 %v55, 256
    %v58 = vpop.permute.xlu0 %57
    %v59 = vlaneseq
    %v60 = vshrl.u32 %v59, 7
    %v61 = vsub.s32 2, %v60
    %v62 = vrot.slane %v30, %v61
    %64 = vbcast.lane.c.b16.xlu0 %v62, 256
    %v65 = vpop.permute.xlu0 %64
    %v66 = vlaneseq
    %v67 = vshrl.u32 %v66, 7
    %v68 = vsub.s32 3, %v67
    %v69 = vrot.slane %v21, %v68
    %71 = vbcast.lane.c.b16.xlu0 %v69, 256
    %v72 = vpop.permute.xlu0 %71
    %v73 = vlaneseq
    %v74 = vshrl.u32 %v73, 7
    %v75 = vsub.s32 3, %v74
    %v76 = vrot.slane %v30, %v75
    %78 = vbcast.lane.c.b16.xlu0 %v76, 256
    %v79 = vpop.permute.xlu0 %78
    %v81 = vunpack.c.l.s4 1966171168
    %v82 = vunpack.c.0.s8 %v81
    %v83 = vlaneseq
    %v84 = vshrl.u32 %v83, 7
    %v85 = vsub.s32 %v82, %v84
    %v86 = vrot.slane %v19, %v85
    %v87 = vcombine.high %v86, %v86
    %v89 = vunpack.c.l.s4 1966171168
    %v90 = vunpack.c.0.s8 %v89
    %v91 = vlaneseq
    %v92 = vshrl.u32 %v91, 7
    %v93 = vsub.s32 %v90, %v92
    %v94 = vrot.slane %v86, %v93
    %v96 = vunpack.c.l.s4 1966171168
    %v97 = vunpack.c.0.s8 %v96
    %v98 = vlaneseq
    %v99 = vshrl.u32 %v98, 7
    %v100 = vsub.s32 %v97, %v99
    %v101 = vrot.slane %v87, %v100
    %v102 = vcombine.high %v94, %v94
    %v103 = vcombine.high %v101, %v101
    %v104 = vunpack.i.l.s16 %v94
    %v105 = vunpack.i.h.s16 %v94
    %v106 = vunpack.i.l.s16 %v101
    %v107 = vunpack.i.h.s16 %v101
    %v108 = vunpack.i.l.s16 %v102
    %v109 = vunpack.i.h.s16 %v102
    %v110 = vunpack.i.l.s16 %v103
    %v111 = vunpack.i.h.s16 %v103
    %v112 = vpack.i.b16 %v104, %v104
    %v113 = vpack.i.b16 %v105, %v105
    %v114 = vpack.i.b16 %v106, %v106
    %v115 = vpack.i.b16 %v107, %v107
    %v116 = vpack.i.b16 %v108, %v108
    %v117 = vpack.i.b16 %v109, %v109
    %v118 = vpack.i.b16 %v110, %v110
    %v119 = vpack.i.b16 %v111, %v111
    %v120 = vlaneseq
    %v121 = vshrl.u32 %v120, 7
    %v122 = vsub.s32 0, %v121
    %v123 = vrot.slane %v112, %v122
    %v124 = vlaneseq
    %v125 = vshrl.u32 %v124, 7
    %v126 = vsub.s32 0, %v125
    %v127 = vrot.slane %v113, %v126
    %v128 = vlaneseq
    %v129 = vshrl.u32 %v128, 7
    %v130 = vsub.s32 0, %v129
    %v131 = vrot.slane %v114, %v130
    %v132 = vlaneseq
    %v133 = vshrl.u32 %v132, 7
    %v134 = vsub.s32 0, %v133
    %v135 = vrot.slane %v115, %v134
    %v136 = vlaneseq
    %v137 = vshrl.u32 %v136, 7
    %v138 = vsub.s32 0, %v137
    %v139 = vrot.slane %v116, %v138
    %v140 = vlaneseq
    %v141 = vshrl.u32 %v140, 7
    %v142 = vsub.s32 0, %v141
    %v143 = vrot.slane %v117, %v142
    %v144 = vlaneseq
    %v145 = vshrl.u32 %v144, 7
    %v146 = vsub.s32 0, %v145
    %v147 = vrot.slane %v118, %v146
    %v148 = vlaneseq
    %v149 = vshrl.u32 %v148, 7
    %v150 = vsub.s32 0, %v149
    %v151 = vrot.slane %v119, %v150
    %v153 = vpack.i.b16 %v123, %v123
    %v154 = vlaneseq
    %v155 = vshrl.u32 %v154, 7
    %v156 = vsub.s32 0, %v155
    %v157 = vrot.slane %v153, %v156
    %v159 = vpack.i.b16 %v127, %v127
    %v160 = vlaneseq
    %v161 = vshrl.u32 %v160, 7
    %v162 = vsub.s32 0, %v161
    %v163 = vrot.slane %v159, %v162
    %v165 = vpack.i.b16 %v131, %v131
    %v166 = vlaneseq
    %v167 = vshrl.u32 %v166, 7
    %v168 = vsub.s32 0, %v167
    %v169 = vrot.slane %v165, %v168
    %v171 = vpack.i.b16 %v135, %v135
    %v172 = vlaneseq
    %v173 = vshrl.u32 %v172, 7
    %v174 = vsub.s32 0, %v173
    %v175 = vrot.slane %v171, %v174
    %v177 = vpack.i.b16 %v139, %v139
    %v178 = vlaneseq
    %v179 = vshrl.u32 %v178, 7
    %v180 = vsub.s32 0, %v179
    %v181 = vrot.slane %v177, %v180
    %v183 = vpack.i.b16 %v143, %v143
    %v184 = vlaneseq
    %v185 = vshrl.u32 %v184, 7
    %v186 = vsub.s32 0, %v185
    %v187 = vrot.slane %v183, %v186
    %v189 = vpack.i.b16 %v147, %v147
    %v190 = vlaneseq
    %v191 = vshrl.u32 %v190, 7
    %v192 = vsub.s32 0, %v191
    %v193 = vrot.slane %v189, %v192
    %v195 = vpack.i.b16 %v151, %v151
    %v196 = vlaneseq
    %v197 = vshrl.u32 %v196, 7
    %v198 = vsub.s32 0, %v197
    %v199 = vrot.slane %v195, %v198
    %v200 = vmul.u16 %v28, %v157
    %v201 = vmul.u16 %v37, %v163
    %v202 = vmul.u16 %v44, %v169
    %v203 = vmul.u16 %v51, %v175
    %v204 = vmul.u16 %v58, %v181
    %v205 = vmul.u16 %v65, %v187
    %v206 = vmul.u16 %v72, %v193
    %v207 = vmul.u16 %v79, %v199
    %v208 = vand.u32 %v200, 16711935
    %v209 = vand.u32 %v201, 16711935
    %v210 = vand.u32 %v202, 16711935
    %v211 = vand.u32 %v203, 16711935
    %v212 = vand.u32 %v204, 16711935
    %v213 = vand.u32 %v205, 16711935
    %v214 = vand.u32 %v206, 16711935
    %v215 = vand.u32 %v207, 16711935
    %vm216 = vcmp.ne.s16.totalorder %v208, 0
    %vm217 = vcmp.ne.s16.totalorder %v209, 0
    %vm218 = vcmp.ne.s16.totalorder %v210, 0
    %vm219 = vcmp.ne.s16.totalorder %v211, 0
    %vm220 = vcmp.ne.s16.totalorder %v212, 0
    %vm221 = vcmp.ne.s16.totalorder %v213, 0
    %vm222 = vcmp.ne.s16.totalorder %v214, 0
    %vm223 = vcmp.ne.s16.totalorder %v215, 0
    %vm224 = vmpackc.even %vm216, %vm216
    %vm225 = vmpackc.even %vm217, %vm217
    %vm226 = vmpackc.even %vm218, %vm218
    %vm227 = vmpackc.even %vm219, %vm219
    %vm228 = vmpackc.even %vm220, %vm220
    %vm229 = vmpackc.even %vm221, %vm221
    %vm230 = vmpackc.even %vm222, %vm222
    %vm231 = vmpackc.even %vm223, %vm223
    %v232 = vsel %vm224, 16843009, 0
    %v233 = vsel %vm225, 16843009, 0
    %v234 = vsel %vm226, 16843009, 0
    %v235 = vsel %vm227, 16843009, 0
    %v236 = vsel %vm228, 16843009, 0
    %v237 = vsel %vm229, 16843009, 0
    %v238 = vsel %vm230, 16843009, 0
    %v239 = vsel %vm231, 16843009, 0
    %vm240 = vcmask 58368
    %241 = vst.msk [vmem:[#allocation2] sm:$0x3] %vm240, %v232
    %242 = vst.msk [vmem:[#allocation2 + $0x2] sm:$0x3] %vm240, %v233
    %243 = vst.msk [vmem:[#allocation2 + $0x4] sm:$0x3] %vm240, %v234
    %244 = vst.msk [vmem:[#allocation2 + $0x6] sm:$0x3] %vm240, %v235
    %245 = vst.msk [vmem:[#allocation2 + $0x8] sm:$0x3] %vm240, %v236
    %246 = vst.msk [vmem:[#allocation2 + $0xa] sm:$0x3] %vm240, %v237
    %247 = vst.msk [vmem:[#allocation2 + $0xc] sm:$0x3] %vm240, %v238
    %248 = vst.msk [vmem:[#allocation2 + $0xe] sm:$0x3] %vm240, %v239
    // Predicated region
    $region10: #{triplet_mask.1} parent=1 // pred_check
      _
    $region11: #{triplet_mask.1} parent=1 // pred_check_branch
      %250 = sbr.rel (0) target = $region13
    $region12: #{triplet_mask.1} parent=1 // pred_region
      %s252 = ssub.s32 256, 256
      %253 = vsyncadd [#allocation3], %s252
      %s254 = sshll.u32 [#allocation2], 4
      %s255 = int_to_ptr.vmem [resolvable:$true] %s254
      %260 = dma.vmem_to_hbm [thread:$0]  %s255, 256, %s2, [#allocation3], 32, 32, 2
    $region13: #{triplet_mask.1} parent=1 // pred_fallthru
      _
    // Predicated region
    $region14: #{triplet_mask.1} parent=1 // pred_check
      _
    $region15: #{triplet_mask.1} parent=1 // pred_check_branch
      %262 = sbr.rel (0) target = $region17
    $region16: #{triplet_mask.1} parent=1 // pred_region
      %263 = dma.done [#allocation3], 256
    $region17: #{triplet_mask.1} parent=1 // pred_fallthru
      _
    %264 = vsyncpa [#allocation3], 1

</llo_original>
